<compile_context>
chip_gen: v7x
topology: tpu7x:2x2x1
jax: 0.10.0
libtpu: 0.0.40
codegen_flags: <defaults>
</compile_context>

<pallas_src>
import math

import jax
import jax.numpy as jnp
from jax import lax
from jax.experimental import pallas as pl
from jax.experimental.pallas import tpu as pltpu

OUT_FEATURES = 2
M_MARGIN = 4                      # module uses m=4 -> cos(4*theta) = 8x^4 - 8x^2 + 1
PI_APPROX = 3.14159265            # same constant the torch code uses

# cos is monotone decreasing on [0, pi], so
#   k = floor(m*theta / PI_APPROX) = #{ j in 1..m : cos_theta <= cos(j*PI_APPROX/m) }
# (can differ from the acos path only at exact f32 threshold equality -- measure zero)
_K_THRESHOLDS = tuple(math.cos(j * PI_APPROX / M_MARGIN) for j in range(1, M_MARGIN + 1))

# 2 MiB x-block at D=32; double-buffered x + in-kernel transpose + temporaries
# stay ~10 MiB, comfortably inside even v5e's scoped-VMEM budget.
_TILE_N_CAP = 16384


def _round_up(v, m):
    return ((v + m - 1) // m) * m


def _choose_tile_n(n):
    n_r = _round_up(max(n, 1), 128)
    if n_r < 1024:
        return n_r
    # Keep >= 2 balanced grid steps (v7x has 2 TensorCores sharing the
    # ("parallel",) axis) while capping the block size for v5e VMEM.
    steps = max(2, pl.cdiv(n_r, _TILE_N_CAP))
    return _round_up(pl.cdiv(n_r, steps), 128)


def _sphere_product_kernel(x_ref, w_ref, label_ref, scale_ref, o_ref):
    # x arrives in its natural (TN, D) layout; one XLU transpose puts the batch
    # axis on lanes. Columns beyond the valid batch range (edge blocks) may hold
    # garbage, but every operation below is column-local, and Pallas masks the
    # out-of-range output store, so garbage never reaches valid results.
    x = x_ref[...].T                                  # (D, TN) f32, batch on lanes
    w_n = w_ref[...]                                  # (C, D)  f32, already normalized
    lab = label_ref[...]                              # (1, TN) i32
    inv_1p_lamb = scale_ref[0, 0]                     # scalar 1/(1+lamb)

    # Feature norms (NormOfFeature) and the F.normalize(eps=1e-12) denominator.
    sumsq = jnp.sum(x * x, axis=0, keepdims=True)                      # (1, TN)
    inv_x_norm = lax.rsqrt(jnp.maximum(sumsq, 1e-24))                  # 1/max(||x||,1e-12)
    x_norm = sumsq * inv_x_norm                                        # == sqrt(sumsq), no extra sqrt

    # raw = normalize(w) @ x^T  -> (C, TN); lane-dense output columns.
    raw = lax.dot_general(
        w_n, x,
        dimension_numbers=(((1,), (0,)), ((), ())),
        preferred_element_type=jnp.float32,
    )
    cos_theta = jnp.clip(raw * inv_x_norm, -1.0, 1.0)                  # (C, TN)

    # cos(4*theta) = 8 x^4 - 8 x^2 + 1   (mlambda[4])
    c2 = cos_theta * cos_theta
    cos_m_theta = 8.0 * c2 * c2 - 8.0 * c2 + 1.0

    # k = floor(m * acos(cos_theta) / PI_APPROX) via threshold counting (no acos).
    k = jnp.zeros_like(cos_theta)
    for t in _K_THRESHOLDS:
        k = k + (cos_theta <= jnp.float32(t)).astype(jnp.float32)

    # (-1)^k with k in {0..4}
    k_mod2 = k - 2.0 * jnp.floor(k * 0.5)
    sign = 1.0 - 2.0 * k_mod2
    phi_theta = sign * cos_m_theta - 2.0 * k

    # one_hot blend as a select along the class (sublane) axis.
    row = lax.broadcasted_iota(jnp.int32, cos_theta.shape, 0)          # (C, TN)
    margin_out = cos_theta + (phi_theta - cos_theta) * inv_1p_lamb
    out = jnp.where(row == lab, margin_out, cos_theta)

    o_ref[...] = out * x_norm                                          # *= NormOfFeature


def sphere_product(x, weight, label, iter_count=1, *, tile_n=None):
    """x: (N, D) f32, weight: (C, D) f32, label: (N,) int32 -> (N, C) f32."""
    n, d = x.shape
    c = weight.shape[0]

    if tile_n is None:
        tile_n = _choose_tile_n(n)
    tile_n = max(128, _round_up(tile_n, 128))
    grid = (pl.cdiv(n, tile_n),)

    # lamb = max(LambdaMin, base * (1 + gamma * iter)^(-power))  (host-side schedule)
    base, gamma, power, lambda_min = 1000.0, 0.12, 1, 5.0
    lamb = max(lambda_min, base * (1.0 + gamma * iter_count) ** (-power))
    scale = jnp.full((1, 1), 1.0 / (1.0 + lamb), dtype=jnp.float32)

    # Weight normalization hoisted out of the kernel (done once, C*D is tiny).
    w_norm = jnp.sqrt(jnp.sum(weight * weight, axis=1, keepdims=True))
    w_n = (weight / jnp.maximum(w_norm, 1e-12)).astype(jnp.float32)

    # No host-side transpose / pad: x is streamed as-is; labels just reshaped.
    x_f32 = jnp.asarray(x, jnp.float32)
    lab2d = label.astype(jnp.int32).reshape(1, n)

    cost = pl.CostEstimate(
        flops=2 * n * d * (c + 1) + 24 * n * c,        # matmul + sumsq + margin math
        transcendentals=n,                             # one rsqrt per batch column
        bytes_accessed=n * d * 4 + c * d * 4 + n * 4 + n * c * 4,
    )

    out_t = pl.pallas_call(
        _sphere_product_kernel,
        out_shape=jax.ShapeDtypeStruct((c, n), jnp.float32),
        grid=grid,
        in_specs=[
            pl.BlockSpec((tile_n, d), lambda i: (i, 0)),               # x tile (natural layout)
            pl.BlockSpec((c, d), lambda i: (0, 0)),                    # full normalized weight
            pl.BlockSpec((1, tile_n), lambda i: (0, i)),               # label tile
            pl.BlockSpec(memory_space=pltpu.MemorySpace.SMEM),         # 1/(1+lamb) scalar
        ],
        out_specs=pl.BlockSpec((c, tile_n), lambda i: (0, i)),         # lane-dense output
        compiler_params=pltpu.CompilerParams(
            dimension_semantics=("parallel",),
            vmem_limit_bytes=32 * 1024 * 1024,                         # headroom on v5e
        ),
        cost_estimate=cost,
    )(x_f32, w_n, lab2d, scale)

    return out_t.T                                                     # (N, C)


def _reference(x, weight, label, iter_count=1):
    base, gamma, power, lambda_min = 1000.0, 0.12, 1, 5.0
    lamb = max(lambda_min, base * (1.0 + gamma * iter_count) ** (-power))
    x_norm = jnp.linalg.norm(x, axis=1, keepdims=True)
    x_n = x / jnp.maximum(x_norm, 1e-12)
    w_n = weight / jnp.maximum(jnp.linalg.norm(weight, axis=1, keepdims=True), 1e-12)
    cos_theta = jnp.clip(x_n @ w_n.T, -1.0, 1.0)
    cos_m = 8.0 * cos_theta ** 4 - 8.0 * cos_theta ** 2 + 1.0
    theta = jnp.arccos(cos_theta)
    k = jnp.floor(M_MARGIN * theta / PI_APPROX)
    sign = 1.0 - 2.0 * jnp.mod(k, 2.0)                 # (-1)^k for integer-valued k
    phi = sign * cos_m - 2.0 * k
    one_hot = jax.nn.one_hot(label, weight.shape[0], dtype=jnp.float32)
    out = one_hot * (phi - cos_theta) / (1.0 + lamb) + cos_theta
    return out * x_norm


if __name__ == "__main__":
    N, HIDDEN = 8, 32  # args.hidden_dim = 32

    key = jax.random.PRNGKey(0)
    kx, kw, kl = jax.random.split(key, 3)

    # deterministic inputs
    x = jax.random.normal(kx, (N, HIDDEN), dtype=jnp.float32)
    label = jax.random.randint(kl, (N,), 0, OUT_FEATURES, dtype=jnp.int32)

    # xavier_uniform init of weight (out_features, in_features)
    bound = math.sqrt(6.0 / (HIDDEN + OUT_FEATURES))
    weight = jax.random.uniform(
        kw, (OUT_FEATURES, HIDDEN), dtype=jnp.float32, minval=-bound, maxval=bound
    )

    out = jax.block_until_ready(sphere_product(x, weight, label, iter_count=1))
    ref = _reference(x, weight, label, iter_count=1)
    assert out.shape == (N, OUT_FEATURES)
    assert jnp.allclose(out, ref, atol=1e-4, rtol=1e-4), (out, ref)

    # Second run exercising a multi-step grid and a partial edge block.
    N2 = 300
    x2 = jax.random.normal(jax.random.PRNGKey(1), (N2, HIDDEN), dtype=jnp.float32)
    lab2 = jax.random.randint(jax.random.PRNGKey(2), (N2,), 0, OUT_FEATURES, dtype=jnp.int32)
    out2 = jax.block_until_ready(sphere_product(x2, weight, lab2, iter_count=3, tile_n=128))
    ref2 = _reference(x2, weight, lab2, iter_count=3)
    assert out2.shape == (N2, OUT_FEATURES)
    assert jnp.allclose(out2, ref2, atol=1e-4, rtol=1e-4)

    print("KERNEL_OK")
</pallas_src>

<mosaic_0001>
module attributes {stable_mosaic.version = 11 : i64} {
  func.func @_sphere_product_kernel(%arg0: i32, %arg1: memref<128x32xf32, #tpu.memory_space<vmem>>, %arg2: memref<2x32xf32, #tpu.memory_space<vmem>>, %arg3: memref<1x128xi32, #tpu.memory_space<vmem>>, %arg4: memref<1x1xf32, #tpu.memory_space<smem>>, %arg5: memref<2x128xf32, #tpu.memory_space<vmem>>) attributes {dimension_semantics = [#tpu.dimension_semantics<parallel>], iteration_bounds = array<i64: 1>, scalar_prefetch = 0 : i64, scratch_operands = 0 : i64, tpu.core_type = #tpu.core_type<tc>, window_params = [{transform_indices = @transform_0, window_bounds = array<i64: 128, 32>}, {pipeline_mode = #tpu.pipeline_mode<synchronous>, transform_indices = @transform_1, window_bounds = array<i64: 2, 32>}, {transform_indices = @transform_2, window_bounds = array<i64: 1, 128>}, {transform_indices = @transform_3, window_bounds = array<i64: 1, 1>}, {transform_indices = @transform_4, window_bounds = array<i64: 2, 128>}]} {
    %c0 = arith.constant 0 : index
    %c0_0 = arith.constant 0 : index
    %0 = vector.load %arg1[%c0, %c0_0] : memref<128x32xf32, #tpu.memory_space<vmem>>, vector<128x32xf32>
    %1 = tpu.transpose %0, [1, 0] : vector<128x32xf32> -> vector<32x128xf32>
    %c0_1 = arith.constant 0 : index
    %c0_2 = arith.constant 0 : index
    %2 = vector.load %arg2[%c0_1, %c0_2] : memref<2x32xf32, #tpu.memory_space<vmem>>, vector<2x32xf32>
    %c0_3 = arith.constant 0 : index
    %c0_4 = arith.constant 0 : index
    %3 = vector.load %arg3[%c0_3, %c0_4] : memref<1x128xi32, #tpu.memory_space<vmem>>, vector<1x128xi32>
    %c0_5 = arith.constant 0 : index
    %c0_6 = arith.constant 0 : index
    %4 = memref.load %arg4[%c0_5, %c0_6] : memref<1x1xf32, #tpu.memory_space<smem>>
    %5 = arith.mulf %1, %1 : vector<32x128xf32>
    %cst = arith.constant dense<0.000000e+00> : vector<128xf32>
    %6 = vector.multi_reduction <add>, %5, %cst [0] : vector<32x128xf32> to vector<128xf32>
    %7 = vector.shape_cast %6 : vector<128xf32> to vector<1x128xf32>
    %cst_7 = arith.constant 1.000000e-24 : f32
    %8 = vector.broadcast %cst_7 : f32 to vector<1x128xf32>
    %9 = arith.maximumf %7, %8 : vector<1x128xf32>
    %10 = math.rsqrt %9 : vector<1x128xf32>
    %11 = arith.mulf %7, %10 : vector<1x128xf32>
    %cst_8 = arith.constant dense<0.000000e+00> : vector<2x128xf32>
    %12 = tpu.matmul %2, %1, %cst_8 {dimension_numbers = #tpu.dot_dimension_numbers<[1], [0], [0], [1], [0, 0, 1, 1], [], []>} : vector<2x32xf32>, vector<32x128xf32>, vector<2x128xf32> -> vector<2x128xf32>
    %13 = vector.broadcast %10 : vector<1x128xf32> to vector<2x128xf32>
    %14 = arith.mulf %12, %13 : vector<2x128xf32>
    %cst_9 = arith.constant -1.000000e+00 : f32
    %cst_10 = arith.constant 1.000000e+00 : f32
    %15 = vector.broadcast %cst_9 : f32 to vector<2x128xf32>
    %16 = arith.maximumf %15, %14 : vector<2x128xf32>
    %17 = vector.broadcast %cst_10 : f32 to vector<2x128xf32>
    %18 = arith.minimumf %17, %16 : vector<2x128xf32>
    %19 = arith.mulf %18, %18 : vector<2x128xf32>
    %cst_11 = arith.constant 8.000000e+00 : f32
    %20 = vector.broadcast %cst_11 : f32 to vector<2x128xf32>
    %21 = arith.mulf %20, %19 : vector<2x128xf32>
    %22 = arith.mulf %21, %19 : vector<2x128xf32>
    %cst_12 = arith.constant 8.000000e+00 : f32
    %23 = vector.broadcast %cst_12 : f32 to vector<2x128xf32>
    %24 = arith.mulf %23, %19 : vector<2x128xf32>
    %25 = arith.subf %22, %24 : vector<2x128xf32>
    %cst_13 = arith.constant 1.000000e+00 : f32
    %26 = vector.broadcast %cst_13 : f32 to vector<2x128xf32>
    %27 = arith.addf %25, %26 : vector<2x128xf32>
    %cst_14 = arith.constant 0.000000e+00 : f32
    %28 = vector.broadcast %cst_14 : f32 to vector<2x128xf32>
    %cst_15 = arith.constant 0.707106769 : f32
    %29 = vector.broadcast %cst_15 : f32 to vector<2x128xf32>
    %30 = arith.cmpf ole, %18, %29 : vector<2x128xf32>
    %31 = arith.extui %30 : vector<2x128xi1> to vector<2x128xi32>
    %32 = arith.sitofp %31 : vector<2x128xi32> to vector<2x128xf32>
    %33 = arith.addf %28, %32 : vector<2x128xf32>
    %cst_16 = arith.constant 1.79489656E-9 : f32
    %34 = vector.broadcast %cst_16 : f32 to vector<2x128xf32>
    %35 = arith.cmpf ole, %18, %34 : vector<2x128xf32>
    %36 = arith.extui %35 : vector<2x128xi1> to vector<2x128xi32>
    %37 = arith.sitofp %36 : vector<2x128xi32> to vector<2x128xf32>
    %38 = arith.addf %33, %37 : vector<2x128xf32>
    %cst_17 = arith.constant -0.707106769 : f32
    %39 = vector.broadcast %cst_17 : f32 to vector<2x128xf32>
    %40 = arith.cmpf ole, %18, %39 : vector<2x128xf32>
    %41 = arith.extui %40 : vector<2x128xi1> to vector<2x128xi32>
    %42 = arith.sitofp %41 : vector<2x128xi32> to vector<2x128xf32>
    %43 = arith.addf %38, %42 : vector<2x128xf32>
    %cst_18 = arith.constant -1.000000e+00 : f32
    %44 = vector.broadcast %cst_18 : f32 to vector<2x128xf32>
    %45 = arith.cmpf ole, %18, %44 : vector<2x128xf32>
    %46 = arith.extui %45 : vector<2x128xi1> to vector<2x128xi32>
    %47 = arith.sitofp %46 : vector<2x128xi32> to vector<2x128xf32>
    %48 = arith.addf %43, %47 : vector<2x128xf32>
    %cst_19 = arith.constant 5.000000e-01 : f32
    %49 = vector.broadcast %cst_19 : f32 to vector<2x128xf32>
    %50 = arith.mulf %48, %49 : vector<2x128xf32>
    %51 = math.floor %50 : vector<2x128xf32>
    %cst_20 = arith.constant 2.000000e+00 : f32
    %52 = vector.broadcast %cst_20 : f32 to vector<2x128xf32>
    %53 = arith.mulf %52, %51 : vector<2x128xf32>
    %54 = arith.subf %48, %53 : vector<2x128xf32>
    %cst_21 = arith.constant 2.000000e+00 : f32
    %55 = vector.broadcast %cst_21 : f32 to vector<2x128xf32>
    %56 = arith.mulf %55, %54 : vector<2x128xf32>
    %cst_22 = arith.constant 1.000000e+00 : f32
    %57 = vector.broadcast %cst_22 : f32 to vector<2x128xf32>
    %58 = arith.subf %57, %56 : vector<2x128xf32>
    %59 = arith.mulf %58, %27 : vector<2x128xf32>
    %cst_23 = arith.constant 2.000000e+00 : f32
    %60 = vector.broadcast %cst_23 : f32 to vector<2x128xf32>
    %61 = arith.mulf %60, %48 : vector<2x128xf32>
    %62 = arith.subf %59, %61 : vector<2x128xf32>
    %63 = tpu.iota {dimensions = array<i32: 0>} : vector<2x128xi32>
    %64 = arith.subf %62, %18 : vector<2x128xf32>
    %65 = vector.broadcast %4 : f32 to vector<2x128xf32>
    %66 = arith.mulf %64, %65 : vector<2x128xf32>
    %67 = arith.addf %18, %66 : vector<2x128xf32>
    %68 = vector.broadcast %3 : vector<1x128xi32> to vector<2x128xi32>
    %69 = arith.cmpi eq, %63, %68 : vector<2x128xi32>
    %70 = arith.select %69, %67, %18 : vector<2x128xi1>, vector<2x128xf32>
    %71 = vector.broadcast %11 : vector<1x128xf32> to vector<2x128xf32>
    %72 = arith.mulf %70, %71 : vector<2x128xf32>
    %c0_24 = arith.constant 0 : index
    %c0_25 = arith.constant 0 : index
    %73 = vector.load %arg5[%c0_24, %c0_25] : memref<2x128xf32, #tpu.memory_space<vmem>>, vector<2x128xf32>
    tpu.vector_store %arg5[%c0_24, %c0_25], %72 {strides = array<i32>} : memref<2x128xf32, #tpu.memory_space<vmem>>, vector<2x128xf32>,
    return
  }
  func.func @transform_0(%arg0: i32) -> (i32, i32) {
    %c0_i32 = arith.constant 0 : i32
    %c0_i32_0 = arith.constant 0 : i32
    return %arg0, %c0_i32 : i32, i32
  }
  func.func @transform_1(%arg0: i32) -> (i32, i32) {
    %c0_i32 = arith.constant 0 : i32
    %c0_i32_0 = arith.constant 0 : i32
    %c0_i32_1 = arith.constant 0 : i32
    return %c0_i32, %c0_i32_0 : i32, i32
  }
  func.func @transform_2(%arg0: i32) -> (i32, i32) {
    %c0_i32 = arith.constant 0 : i32
    %c0_i32_0 = arith.constant 0 : i32
    return %c0_i32, %arg0 : i32, i32
  }
  func.func @transform_3(%arg0: i32) -> (i32, i32) {
    %c0_i32 = arith.constant 0 : i32
    %c0_i32_0 = arith.constant 0 : i32
    %c0_i32_1 = arith.constant 0 : i32
    return %c0_i32, %c0_i32_0 : i32, i32
  }
  func.func @transform_4(%arg0: i32) -> (i32, i32) {
    %c0_i32 = arith.constant 0 : i32
    %c0_i32_0 = arith.constant 0 : i32
    return %c0_i32, %arg0 : i32, i32
  }
}

</mosaic_0001>

<llo_original>
// kernel: tpu_custom_call.1
$region0: #{tpu_custom_call.1}
  #allocation0 [shape = 'u32[]', space=smem, size = 0x4, offset = 0x4, fixed_abs, tag = 'smem constant byte address 0x4 - core index']
  #allocation1 [shape = 'u32[144,128]{1,0:T(1,128)}', space=vmem, size = 0x12000, scoped, tag = 'internal scratch']
  #allocation2 [shape = 'f32[1,1]{1,0:T(1,128)S(6)}', space=smem, size = 0x200, scoped, tag = 'scoped memory for tpu_custom_call.1']
  %s0 = inlined_call_operand.hbm [shape: f32[8,32], index: 0, kind: input, shape index: {}]
  %s1 = inlined_call_operand.vmem [shape: f32[2,32], index: 1, kind: input, shape index: {}]
  %s2 = inlined_call_operand.vmem [shape: s32[1,8], index: 2, kind: input, shape index: {}]
  %s3 = inlined_call_operand.<no memory space> [shape: f32[1,1], index: 3, kind: input, shape index: {}]
  %s4 = inlined_call_operand.hbm [shape: f32[2,8], index: 4, kind: output, shape index: {}]
  %s5 = sld [smem:[#allocation0]]
  $region30: #{tpu_custom_call.1} parent=0
    _
  %s7 = ssub.s32 1, %s5
  %s8 = scalar_select 0, %s7, %s5
  %9 = sst [smem:[#allocation2]] %s3
  $region1: #{tpu_custom_call.1} parent=0
    #allocation3 [shape = 'u8[65536]{0}', space=vmem, size = 0x10000, scoped, tag = 'input window, operand 0, single buffered']
    #allocation4 [shape = 's32[1]{0}', space=sflag, size = 0x4, scoped, tag = 'scoped memory for tpu_custom_call.1']
    #allocation5 [shape = 's32[1]{0}', space=sflag, size = 0x4, scoped, tag = 'scoped memory for tpu_custom_call.1']
    #allocation6 [shape = 'u8[1024]{0}', space=vmem, size = 0x400, scoped, tag = 'output window, operand 0, single buffered']
    %10 = vsyncpa [#allocation4], 0
    %11 = vsyncpa [#allocation5], 0
    // Predicated region
    $region2: #{tpu_custom_call.1} parent=1 // pred_check
      _
    $region3: #{tpu_custom_call.1} parent=1 // pred_check_branch
      %13 = sbr.rel (0) target = $region5
    $region4: #{tpu_custom_call.1} parent=1 // pred_region
      %s15 = ssub.s32 2048, 128
      %16 = vsyncadd [#allocation4], %s15
      %s17 = sshll.u32 [#allocation3], 4
      %s18 = int_to_ptr.vmem [resolvable:$true] %s17
      %23 = dma.hbm_to_vmem [thread:$0]  %s0, 128, %s18, [#allocation4], 128, 128, 8
    $region5: #{tpu_custom_call.1} parent=1 // pred_fallthru
      _
    // Predicated region
    $region6: #{tpu_custom_call.1} parent=1 // pred_check
      _
    $region7: #{tpu_custom_call.1} parent=1 // pred_check_branch
      %25 = sbr.rel (0) target = $region9
    $region8: #{tpu_custom_call.1} parent=1 // pred_region
      _
    $region9: #{tpu_custom_call.1} parent=1 // pred_fallthru
      _
    // Predicated region
    $region10: #{tpu_custom_call.1} parent=1 // pred_check
      _
    $region11: #{tpu_custom_call.1} parent=1 // pred_check_branch
      %27 = sbr.rel (0) target = $region13
    $region12: #{tpu_custom_call.1} parent=1 // pred_region
      _
    $region13: #{tpu_custom_call.1} parent=1 // pred_fallthru
      _
    // Predicated region
    $region14: #{tpu_custom_call.1} parent=1 // pred_check
      _
    $region15: #{tpu_custom_call.1} parent=1 // pred_check_branch
      %29 = sbr.rel (0) target = $region17
    $region16: #{tpu_custom_call.1} parent=1 // pred_region
      _
    $region17: #{tpu_custom_call.1} parent=1 // pred_fallthru
      _
    // Predicated region
    $region18: #{tpu_custom_call.1} parent=1 // pred_check
      _
    $region19: #{tpu_custom_call.1} parent=1 // pred_check_branch
      %31 = sbr.rel (0) target = $region21
    $region20: #{tpu_custom_call.1} parent=1 // pred_region
      %32 = dma.done [#allocation4], 2048
    $region21: #{tpu_custom_call.1} parent=1 // pred_fallthru
      _
    %v33 = vld [vmem:[#allocation3] sm:$0xff]
    %v34 = vld [vmem:[#allocation3 + $0x8] sm:$0xff]
    %v35 = vld [vmem:[#allocation3 + $0x10] sm:$0xff]
    %v36 = vld [vmem:[#allocation3 + $0x18] sm:$0xff]
    %v37 = vld [vmem:[#allocation3 + $0x20] sm:$0xff]
    %v38 = vld [vmem:[#allocation3 + $0x28] sm:$0xff]
    %v39 = vld [vmem:[#allocation3 + $0x30] sm:$0xff]
    %v40 = vld [vmem:[#allocation3 + $0x38] sm:$0xff]
    %v41 = vld [vmem:[#allocation3 + $0x40] sm:$0xff]
    %v42 = vld [vmem:[#allocation3 + $0x48] sm:$0xff]
    %v43 = vld [vmem:[#allocation3 + $0x50] sm:$0xff]
    %v44 = vld [vmem:[#allocation3 + $0x58] sm:$0xff]
    %v45 = vld [vmem:[#allocation3 + $0x60] sm:$0xff]
    %v46 = vld [vmem:[#allocation3 + $0x68] sm:$0xff]
    %v47 = vld [vmem:[#allocation3 + $0x70] sm:$0xff]
    %v48 = vld [vmem:[#allocation3 + $0x78] sm:$0xff]
    %49 = vxpose.xlu0.b32.start [1/16] %v33, 128
    %50 = vxpose.xlu0.b32.cont [2/16] %v34, 128
    %51 = vxpose.xlu0.b32.cont [3/16] %v35, 128
    %52 = vxpose.xlu0.b32.cont [4/16] %v36, 128
    %53 = vxpose.xlu0.b32.cont [5/16] %v37, 128
    %54 = vxpose.xlu0.b32.cont [6/16] %v38, 128
    %55 = vxpose.xlu0.b32.cont [7/16] %v39, 128
    %56 = vxpose.xlu0.b32.cont [8/16] %v40, 128
    %57 = vxpose.xlu0.b32.cont [9/16] %v41, 128
    %58 = vxpose.xlu0.b32.cont [10/16] %v42, 128
    %59 = vxpose.xlu0.b32.cont [11/16] %v43, 128
    %60 = vxpose.xlu0.b32.cont [12/16] %v44, 128
    %61 = vxpose.xlu0.b32.cont [13/16] %v45, 128
    %62 = vxpose.xlu0.b32.cont [14/16] %v46, 128
    %63 = vxpose.xlu0.b32.cont [15/16] %v47, 128
    %64 = vxpose.xlu0.b32.end [16/16] %v48, 128
    %v65 = vpop.trf.xlu0
    %v66 = vpop.trf.xlu0
    %v67 = vpop.trf.xlu0
    %v68 = vpop.trf.xlu0
    %v69 = vpop.trf.xlu0
    %v70 = vpop.trf.xlu0
    %v71 = vpop.trf.xlu0
    %v72 = vpop.trf.xlu0
    %v73 = vpop.trf.xlu0
    %v74 = vpop.trf.xlu0
    %v75 = vpop.trf.xlu0
    %v76 = vpop.trf.xlu0
    %v77 = vpop.trf.xlu0
    %v78 = vpop.trf.xlu0
    %v79 = vpop.trf.xlu0
    %v80 = vpop.trf.xlu0
    %v81 = vld [vmem:[%s1] sm:$0x3]
    %v82 = vld [vmem:[%s2] sm:$0x1]
    %s83 = sld [smem:[#allocation2]]
    %v84 = vmul.f32 %v65, %v65
    %v85 = vmul.f32 %v66, %v66
    %v86 = vmul.f32 %v67, %v67
    %v87 = vmul.f32 %v68, %v68
    %v88 = vadd.f32 %v84, %v85
    %v89 = vadd.f32 %v88, %v86
    %v90 = vadd.f32 %v89, %v87
    %v91 = vrot.slane %v90, 4
    %v92 = vadd.f32 %v90, %v91
    %v93 = vrot.slane %v92, 2
    %v94 = vadd.f32 %v92, %v93
    %v95 = vrot.slane %v94, 1
    %v96 = vadd.f32 %v94, %v95
    %v97 = vmax.f32 %v96, 1e-24
    %v98 = vrsqrt.pop %v97
    %v99 = vmul.f32 %v96, %v98
    %vm100 = vcmask 261120
    %v102 = vsel %vm100, %v81, 0
    %104 = vmatprep.subr.mxu0 0.0
    %105 = vmatpush1.msra.mxu0 %v65
    %106 = vmatprep.subr.mxu0 0.0
    %107 = vmatpush1.msra.mxu0 %v66
    %108 = vmatprep.subr.mxu0 0.0
    %109 = vmatpush1.msra.mxu0 %v67
    %110 = vmatprep.subr.mxu0 0.0
    %111 = vmatpush1.msra.mxu0 %v68
    %112 = vmatprep.subr.mxu0 0.0
    %113 = vmatpush1.msra.mxu0 0.0
    %114 = vmatprep.subr.mxu0 0.0
    %115 = vmatpush1.msra.mxu0 0.0
    %116 = vmatprep.subr.mxu0 0.0
    %117 = vmatpush1.msra.mxu0 0.0
    %118 = vmatprep.subr.mxu0 0.0
    %119 = vmatpush1.msra.mxu0 0.0
    %120 = vmatprep.subr.mxu0 0.0
    %121 = vmatpush1.msra.mxu0 0.0
    %122 = vmatprep.subr.mxu0 0.0
    %123 = vmatpush1.msra.mxu0 0.0
    %124 = vmatprep.subr.mxu0 0.0
    %125 = vmatpush1.msra.mxu0 0.0
    %126 = vmatprep.subr.mxu0 0.0
    %127 = vmatpush1.msra.mxu0 0.0
    %128 = vmatprep.subr.mxu0 0.0
    %129 = vmatpush1.msra.mxu0 0.0
    %130 = vmatprep.subr.mxu0 0.0
    %131 = vmatpush1.msra.mxu0 0.0
    %132 = vmatprep.subr.mxu0 0.0
    %133 = vmatpush1.msra.mxu0 0.0
    %134 = vmatprep.subr.mxu0 0.0
    %135 = vmatpush1.msra.mxu0 0.0
    %136 = vmatprep.subr.mxu0 0.0
    %137 = vmatpush1.msra.mxu0 0.0
    %138 = vmatprep.subr.mxu0 0.0
    %139 = vmatpush1.msra.mxu0 0.0
    %140 = vmatprep.subr.mxu0 0.0
    %141 = vmatpush1.msra.mxu0 0.0
    %142 = vmatprep.subr.mxu0 0.0
    %143 = vmatpush1.msra.mxu0 0.0
    %144 = vmatprep.subr.mxu0 0.0
    %145 = vmatpush1.msra.mxu0 0.0
    %146 = vmatprep.subr.mxu0 0.0
    %147 = vmatpush1.msra.mxu0 0.0
    %148 = vmatprep.subr.mxu0 0.0
    %149 = vmatpush1.msra.mxu0 0.0
    %150 = vmatprep.subr.mxu0 0.0
    %151 = vmatpush1.msra.mxu0 0.0
    %152 = vmatprep.subr.mxu0 0.0
    %153 = vmatpush1.msra.mxu0 0.0
    %154 = vmatprep.subr.mxu0 0.0
    %155 = vmatpush1.msra.mxu0 0.0
    %156 = vmatprep.subr.mxu0 0.0
    %157 = vmatpush1.msra.mxu0 0.0
    %158 = vmatprep.subr.mxu0 0.0
    %159 = vmatpush1.msra.mxu0 0.0
    %160 = vmatprep.subr.mxu0 0.0
    %161 = vmatpush1.msra.mxu0 0.0
    %162 = vmatprep.subr.mxu0 0.0
    %163 = vmatpush1.msra.mxu0 0.0
    %164 = vmatprep.subr.mxu0 0.0
    %165 = vmatpush1.msra.mxu0 0.0
    %166 = vmatprep.subr.mxu0 0.0
    %167 = vmatpush1.msra.mxu0 0.0
    %168 = vmatprep.mubr.f32.mxu0 0.0
    %169 = vmatmul.mubr.f32.gmra.mrb[0].mxu0 %v102
    %v170 = vpop.f32.mrb[0].mxu0
    %v171 = vadd.f32 0.0, %v170
    %v172 = vpop.f32.mrb[0].mxu0
    %173 = vdwg.mxu0
    %v174 = vmul.f32 %v171, %v98
    %v175 = vmax.f32 %v174, -1.0
    %v176 = vmin.f32 %v175, 1.0
    %v177 = vmul.f32 %v176, %v176
    %v178 = vmul.f32 %v177, 8.0
    %v179 = vmul.f32 %v178, %v177
    %v180 = vsub.f32 %v179, %v178
    %v181 = vadd.f32 %v180, 1.0
    %vm182 = vcmp.le.f32.partialorder %v176, 0.70710677
    %v183 = vsel %vm182, 1, 0
    %v184 = vcvt.s32.f32 %v183
    %v185 = vadd.f32 %v184, 0.0
    %vm186 = vcmp.le.f32.partialorder %v176, 1.7948966e-09
    %v187 = vsel %vm186, 1, 0
    %v188 = vcvt.s32.f32 %v187
    %v189 = vadd.f32 %v185, %v188
    %vm190 = vcmp.le.f32.partialorder %v176, -0.70710677
    %v191 = vsel %vm190, 1, 0
    %v192 = vcvt.s32.f32 %v191
    %v193 = vadd.f32 %v189, %v192
    %vm194 = vcmp.le.f32.partialorder %v176, -1.0
    %v195 = vsel %vm194, 1, 0
    %v196 = vcvt.s32.f32 %v195
    %v197 = vadd.f32 %v193, %v196
    %v198 = vmul.f32 %v197, 0.5
    %v199 = vfloor.f32 %v198
    %v200 = vmul.f32 %v199, 2.0
    %v201 = vsub.f32 %v197, %v200
    %v202 = vmul.f32 %v201, 2.0
    %v203 = vsub.f32 1.0, %v202
    %v204 = vmul.f32 %v203, %v181
    %v205 = vmul.f32 %v197, 2.0
    %v206 = vsub.f32 %v204, %v205
    %v207 = vlaneseq
    %v208 = vshrl.u32 %v207, 7
    %v209 = vsub.f32 %v206, %v176
    %v210 = vstv %s83
    %v211 = vmul.f32 %v209, %v210
    %v212 = vadd.f32 %v176, %v211
    %v213 = vlaneseq
    %v214 = vshrl.u32 %v213, 7
    %v215 = vsub.s32 0, %v214
    %v216 = vrot.slane %v82, %v215
    %vm217 = vcmp.eq.s32.totalorder %v208, %v216
    %v218 = vsel %vm217, %v212, %v176
    %v219 = vmul.f32 %v218, %v99
    %220 = vst [vmem:[#allocation6] sm:$0x3] %v219
    // Predicated region
    $region22: #{tpu_custom_call.1} parent=1 // pred_check
      _
    $region23: #{tpu_custom_call.1} parent=1 // pred_check_branch
      %222 = sbr.rel (0) target = $region25
    $region24: #{tpu_custom_call.1} parent=1 // pred_region
      %s224 = ssub.s32 32, 32
      %225 = vsyncadd [#allocation5], %s224
      %s227 = sshll.u32 [#allocation6], 4
      %s228 = int_to_ptr.vmem [resolvable:$true] %s227
      %230 = dma.vmem_to_hbm [thread:$0]  %s228, 32, %s4, [#allocation5]
    $region25: #{tpu_custom_call.1} parent=1 // pred_fallthru
      _
    // Predicated region
    $region26: #{tpu_custom_call.1} parent=1 // pred_check
      _
    $region27: #{tpu_custom_call.1} parent=1 // pred_check_branch
      %232 = sbr.rel (0) target = $region29
    $region28: #{tpu_custom_call.1} parent=1 // pred_region
      %233 = dma.done [#allocation5], 32
    $region29: #{tpu_custom_call.1} parent=1 // pred_fallthru
      _
    %234 = vsyncpa [#allocation4], 1
    %235 = vsyncpa [#allocation5], 1

</llo_original>
